<compile_context>
chip_gen: v5e
topology: v5e:2x2
jax: 0.10.0
libtpu: 0.0.40
codegen_flags: <defaults>
</compile_context>

<pallas_src>
import functools

import jax
import jax.numpy as jnp
from jax.experimental import pallas as pl
from jax.experimental.pallas import tpu as pltpu


def _round_up(x: int, m: int) -> int:
    return ((x + m - 1) // m) * m


def _pad2d(a, rows: int, cols: int):
    r, c = a.shape
    if (r, c) == (rows, cols):
        return a
    return jnp.pad(a, ((0, rows - r), (0, cols - c)))


def _ffn_kernel_acc(x_ref, w_ref, b_ref, o_ref, acc_ref, *, use_activation: bool):
    """Multi-step K reduction: resident f32 accumulator in VMEM."""
    k = pl.program_id(2)

    @pl.when(k == 0)
    def _init():
        acc_ref[...] = jnp.zeros_like(acc_ref)

    acc_ref[...] += jnp.dot(
        x_ref[...], w_ref[...], preferred_element_type=jnp.float32
    )

    @pl.when(k == pl.num_programs(2) - 1)
    def _finalize():
        y = acc_ref[...] + b_ref[...]  # (tm, tn) + (1, tn) broadcast
        if use_activation:
            y = jnp.maximum(y, 0.0)
        o_ref[...] = y.astype(o_ref.dtype)


def _ffn_kernel_single(x_ref, w_ref, b_ref, o_ref, *, use_activation: bool):
    """Whole K fits in one tile: no scratch accumulator, direct store."""
    y = jnp.dot(x_ref[...], w_ref[...], preferred_element_type=jnp.float32)
    y = y + b_ref[...]
    if use_activation:
        y = jnp.maximum(y, 0.0)
    o_ref[...] = y.astype(o_ref.dtype)


def feedforward_layer(
    x,
    weight,
    bias,
    activation: bool = True,
    *,
    tm: int = 256,
    tn: int = 256,
    tk: int = 512,
    compute_dtype=None,
):
    """Pallas equivalent of FeedforwardLayer.forward (Linear + optional ReLU).

    x:      (..., K) — batch dims, in_size
    weight: (K, N)   — in_size, out_size (transpose of torch nn.Linear.weight)
    bias:   (N,)
    compute_dtype: optionally cast x/weight (e.g. jnp.bfloat16) for full-rate
      MXU; accumulation stays f32 and the output keeps x's original dtype.
    """
    orig_shape = x.shape
    K = orig_shape[-1]
    x2 = x.reshape(-1, K)
    M = x2.shape[0]
    K2, N = weight.shape
    assert K == K2, (K, K2)
    out_dtype = x.dtype

    if compute_dtype is not None:
        x2 = x2.astype(compute_dtype)
        weight = weight.astype(compute_dtype)

    # Clamp tile sizes to the (aligned) problem size; keep (8, 128) alignment.
    tm = min(tm, _round_up(M, 8))
    tn = min(tn, _round_up(N, 128))
    tk = min(tk, _round_up(K, 128))

    # Pad so every tile is full — lane-dense stores, no masked vst.
    Mp, Np, Kp = _round_up(M, tm), _round_up(N, tn), _round_up(K, tk)
    x_p = _pad2d(x2, Mp, Kp)
    w_p = _pad2d(weight, Kp, Np)
    b_p = _pad2d(bias.reshape(1, N).astype(jnp.float32), 1, Np)

    k_steps = Kp // tk
    grid = (Mp // tm, Np // tn, k_steps)

    in_specs = [
        pl.BlockSpec((tm, tk), lambda i, j, k: (i, k)),   # x tile
        pl.BlockSpec((tk, tn), lambda i, j, k: (k, j)),   # weight tile
        pl.BlockSpec((1, tn), lambda i, j, k: (0, j)),    # bias tile
    ]
    out_spec = pl.BlockSpec((tm, tn), lambda i, j, k: (i, j))

    if k_steps == 1:
        kernel = functools.partial(_ffn_kernel_single, use_activation=activation)
        scratch_shapes = []
    else:
        kernel = functools.partial(_ffn_kernel_acc, use_activation=activation)
        scratch_shapes = [pltpu.VMEM((tm, tn), jnp.float32)]

    out = pl.pallas_call(
        kernel,
        out_shape=jax.ShapeDtypeStruct((Mp, Np), out_dtype),
        grid_spec=pltpu.PrefetchScalarGridSpec(
            num_scalar_prefetch=0,
            grid=grid,
            in_specs=in_specs,
            out_specs=out_spec,
            scratch_shapes=scratch_shapes,
        ),
        compiler_params=pltpu.CompilerParams(
            # M/N independent (megacore-shardable), K is the accumulator axis.
            dimension_semantics=("parallel", "parallel", "arbitrary"),
            vmem_limit_bytes=64 << 20,
        ),
        cost_estimate=pl.CostEstimate(
            flops=2 * Mp * Np * Kp,
            transcendentals=0,
            bytes_accessed=(
                Mp * Kp * x_p.dtype.itemsize
                + Kp * Np * w_p.dtype.itemsize
                + Np * 4
                + Mp * Np * jnp.dtype(out_dtype).itemsize
            ),
        ),
    )(x_p, w_p, b_p)

    if (Mp, Np) != (M, N):
        out = out[:M, :N]
    return out.reshape(orig_shape[:-1] + (N,))


def _reference(x, weight, bias, activation: bool):
    y = x @ weight + bias
    if activation:
        y = jnp.maximum(y, 0.0)
    return y


if __name__ == "__main__":
    key = jax.random.PRNGKey(0)
    batch, in_size, out_size = 8, 32, 64

    k_x, k_w, k_b = jax.random.split(key, 3)
    x = jax.random.normal(k_x, (batch, in_size), dtype=jnp.float32)
    # Parameter init mimicking nn.Linear's uniform(-1/sqrt(in), 1/sqrt(in)).
    bound = 1.0 / (in_size ** 0.5)
    weight = jax.random.uniform(
        k_w, (in_size, out_size), minval=-bound, maxval=bound, dtype=jnp.float32
    )
    bias = jax.random.uniform(
        k_b, (out_size,), minval=-bound, maxval=bound, dtype=jnp.float32
    )

    # f32 path (exact vs reference), ReLU on.
    out = jax.block_until_ready(feedforward_layer(x, weight, bias, activation=True))
    ref = _reference(x, weight, bias, activation=True)
    assert out.shape == (batch, out_size), out.shape
    assert jnp.allclose(out, ref, atol=1e-5, rtol=1e-5), "mismatch vs reference (relu)"

    # No-activation path.
    out_noact = jax.block_until_ready(
        feedforward_layer(x, weight, bias, activation=False)
    )
    ref_noact = _reference(x, weight, bias, activation=False)
    assert jnp.allclose(out_noact, ref_noact, atol=1e-5, rtol=1e-5), "mismatch (no relu)"

    # bf16 compute path (MXU-native), f32 accumulate — loose tolerance.
    out_bf16 = jax.block_until_ready(
        feedforward_layer(x, weight, bias, activation=True, compute_dtype=jnp.bfloat16)
    )
    assert jnp.allclose(out_bf16, ref, atol=5e-2, rtol=5e-2), "mismatch (bf16 path)"

    # Larger problem exercising the multi-K-step accumulator path (forced small tk)
    # and leading-batch-dim flattening.
    kx2, kw2, kb2 = jax.random.split(jax.random.PRNGKey(1), 3)
    x_big = jax.random.normal(kx2, (2, 96, 384), dtype=jnp.float32)
    w_big = jax.random.normal(kw2, (384, 256), dtype=jnp.float32) * 0.05
    b_big = jax.random.normal(kb2, (256,), dtype=jnp.float32) * 0.05
    out_big = jax.block_until_ready(
        feedforward_layer(x_big, w_big, b_big, activation=True, tk=128)
    )
    ref_big = _reference(x_big, w_big, b_big, activation=True)
    assert out_big.shape == (2, 96, 256), out_big.shape
    assert jnp.allclose(out_big, ref_big, atol=1e-4, rtol=1e-4), "mismatch (multi-k)"

    print("KERNEL_OK")
</pallas_src>

<mosaic_0001>
module attributes {stable_mosaic.version = 11 : i64} {
  func.func @_ffn_kernel_single(%arg0: i32, %arg1: i32, %arg2: i32, %arg3: memref<8x128xf32, #tpu.memory_space<vmem>>, %arg4: memref<128x128xf32, #tpu.memory_space<vmem>>, %arg5: memref<1x128xf32, #tpu.memory_space<vmem>>, %arg6: memref<8x128xf32, #tpu.memory_space<vmem>>) attributes {dimension_semantics = [#tpu.dimension_semantics<parallel>, #tpu.dimension_semantics<parallel>, #tpu.dimension_semantics<arbitrary>], iteration_bounds = array<i64: 1, 1, 1>, scalar_prefetch = 0 : i64, scratch_operands = 0 : i64, tpu.core_type = #tpu.core_type<tc>, window_params = [{transform_indices = @transform_0, window_bounds = array<i64: 8, 128>}, {transform_indices = @transform_1, window_bounds = array<i64: 128, 128>}, {transform_indices = @transform_2, window_bounds = array<i64: 1, 128>}, {transform_indices = @transform_3, window_bounds = array<i64: 8, 128>}]} {
    %c0 = arith.constant 0 : index
    %c0_0 = arith.constant 0 : index
    %0 = vector.load %arg3[%c0, %c0_0] : memref<8x128xf32, #tpu.memory_space<vmem>>, vector<8x128xf32>
    %c0_1 = arith.constant 0 : index
    %c0_2 = arith.constant 0 : index
    %1 = vector.load %arg4[%c0_1, %c0_2] : memref<128x128xf32, #tpu.memory_space<vmem>>, vector<128x128xf32>
    %cst = arith.constant dense<0.000000e+00> : vector<8x128xf32>
    %2 = tpu.matmul %0, %1, %cst {dimension_numbers = #tpu.dot_dimension_numbers<[1], [0], [0], [1], [0, 0, 1, 1], [], []>} : vector<8x128xf32>, vector<128x128xf32>, vector<8x128xf32> -> vector<8x128xf32>
    %c0_3 = arith.constant 0 : index
    %c0_4 = arith.constant 0 : index
    %3 = vector.load %arg5[%c0_3, %c0_4] : memref<1x128xf32, #tpu.memory_space<vmem>>, vector<1x128xf32>
    %4 = vector.broadcast %3 : vector<1x128xf32> to vector<8x128xf32>
    %5 = arith.addf %2, %4 : vector<8x128xf32>
    %cst_5 = arith.constant 0.000000e+00 : f32
    %6 = vector.broadcast %cst_5 : f32 to vector<8x128xf32>
    %7 = arith.maximumf %5, %6 : vector<8x128xf32>
    %c0_6 = arith.constant 0 : index
    %c0_7 = arith.constant 0 : index
    %8 = vector.load %arg6[%c0_6, %c0_7] : memref<8x128xf32, #tpu.memory_space<vmem>>, vector<8x128xf32>
    tpu.vector_store %arg6[%c0_6, %c0_7], %7 {strides = array<i32>} : memref<8x128xf32, #tpu.memory_space<vmem>>, vector<8x128xf32>,
    return
  }
  func.func @transform_0(%arg0: i32, %arg1: i32, %arg2: i32) -> (i32, i32) {
    %c0_i32 = arith.constant 0 : i32
    return %arg0, %arg2 : i32, i32
  }
  func.func @transform_1(%arg0: i32, %arg1: i32, %arg2: i32) -> (i32, i32) {
    %c0_i32 = arith.constant 0 : i32
    return %arg2, %arg1 : i32, i32
  }
  func.func @transform_2(%arg0: i32, %arg1: i32, %arg2: i32) -> (i32, i32) {
    %c0_i32 = arith.constant 0 : i32
    %c0_i32_0 = arith.constant 0 : i32
    return %c0_i32, %arg1 : i32, i32
  }
  func.func @transform_3(%arg0: i32, %arg1: i32, %arg2: i32) -> (i32, i32) {
    %c0_i32 = arith.constant 0 : i32
    return %arg0, %arg1 : i32, i32
  }
}

</mosaic_0001>

<llo_original>
// kernel: tpu_custom_call.1
$region0: #{tpu_custom_call.1}
  #allocation0 [shape = 'u32[]', space=smem, size = 0x4, offset = 0x4, fixed_abs, tag = 'smem constant byte address 0x4 - core index']
  #allocation1 [shape = 'u32[72,128]{1,0:T(1,128)}', space=vmem, size = 0x9000, scoped, tag = 'internal scratch']
  %s0 = inlined_call_operand.hbm [shape: f32[8,128], index: 0, kind: input, shape index: {}]
  %s1 = inlined_call_operand.hbm [shape: f32[128,128], index: 1, kind: input, shape index: {}]
  %s2 = inlined_call_operand.vmem [shape: f32[1,128], index: 2, kind: input, shape index: {}]
  %s3 = inlined_call_operand.hbm [shape: f32[8,128], index: 3, kind: output, shape index: {}]
  %s4 = sld [smem:[#allocation0]]
  $region30: #{tpu_custom_call.1} parent=0
    _
  %s6 = ssub.s32 1, %s4
  %s7 = scalar_select 0, %s6, %s4
  $region1: #{tpu_custom_call.1} parent=0
    #allocation2 [shape = 'u8[4096]{0}', space=vmem, size = 0x1000, scoped, tag = 'input window, operand 0, single buffered']
    #allocation3 [shape = 's32[1]{0}', space=sflag, size = 0x4, scoped, tag = 'scoped memory for tpu_custom_call.1']
    #allocation4 [shape = 's32[1]{0}', space=sflag, size = 0x4, scoped, tag = 'scoped memory for tpu_custom_call.1']
    #allocation5 [shape = 'u8[65536]{0}', space=vmem, size = 0x10000, scoped, tag = 'input window, operand 1, single buffered']
    #allocation6 [shape = 's32[1]{0}', space=sflag, size = 0x4, scoped, tag = 'scoped memory for tpu_custom_call.1']
    #allocation7 [shape = 'u8[4096]{0}', space=vmem, size = 0x1000, scoped, tag = 'output window, operand 0, single buffered']
    %8 = vsyncpa [#allocation3], 0
    %9 = vsyncpa [#allocation6], 0
    %10 = vsyncpa [#allocation4], 0
    // Predicated region
    $region2: #{tpu_custom_call.1} parent=1 // pred_check
      _
    $region3: #{tpu_custom_call.1} parent=1 // pred_check_branch
      %12 = sbr.rel (0) target = $region5
    $region4: #{tpu_custom_call.1} parent=1 // pred_region
      %14 = vsyncadd [#allocation3], 0
      %s16 = sshll.u32 %s0, 4
      %s17 = int_to_ptr.hbm [resolvable:$true] %s16
      %s18 = sshll.u32 [#allocation2], 4
      %s19 = int_to_ptr.vmem [resolvable:$true] %s18
      %21 = dma.hbm_to_vmem [thread:$0]  %s17, 128, %s19, [#allocation3]
    $region5: #{tpu_custom_call.1} parent=1 // pred_fallthru
      _
    // Predicated region
    $region6: #{tpu_custom_call.1} parent=1 // pred_check
      _
    $region7: #{tpu_custom_call.1} parent=1 // pred_check_branch
      %23 = sbr.rel (0) target = $region9
    $region8: #{tpu_custom_call.1} parent=1 // pred_region
      %25 = vsyncadd [#allocation6], 0
      %s26 = sshll.u32 %s1, 4
      %s27 = int_to_ptr.hbm [resolvable:$true] %s26
      %s28 = sshll.u32 [#allocation5], 4
      %s29 = int_to_ptr.vmem [resolvable:$true] %s28
      %34 = dma.hbm_to_vmem [thread:$0]  %s27, 2048, %s29, [#allocation6], 128, 128, 8
    $region9: #{tpu_custom_call.1} parent=1 // pred_fallthru
      _
    // Predicated region
    $region10: #{tpu_custom_call.1} parent=1 // pred_check
      _
    $region11: #{tpu_custom_call.1} parent=1 // pred_check_branch
      %36 = sbr.rel (0) target = $region13
    $region12: #{tpu_custom_call.1} parent=1 // pred_region
      _
    $region13: #{tpu_custom_call.1} parent=1 // pred_fallthru
      _
    // Predicated region
    $region14: #{tpu_custom_call.1} parent=1 // pred_check
      _
    $region15: #{tpu_custom_call.1} parent=1 // pred_check_branch
      %38 = sbr.rel (0) target = $region17
    $region16: #{tpu_custom_call.1} parent=1 // pred_region
      %40 = dma.done [#allocation3], 128
    $region17: #{tpu_custom_call.1} parent=1 // pred_fallthru
      _
    // Predicated region
    $region18: #{tpu_custom_call.1} parent=1 // pred_check
      _
    $region19: #{tpu_custom_call.1} parent=1 // pred_check_branch
      %42 = sbr.rel (0) target = $region21
    $region20: #{tpu_custom_call.1} parent=1 // pred_region
      %44 = dma.done [#allocation6], 2048
    $region21: #{tpu_custom_call.1} parent=1 // pred_fallthru
      _
    %v45 = vld [vmem:[#allocation2] sm:$0xff]
    %v46 = vld [vmem:[#allocation5] sm:$0xff]
    %v47 = vld [vmem:[#allocation5 + $0x8] sm:$0xff]
    %v48 = vld [vmem:[#allocation5 + $0x10] sm:$0xff]
    %v49 = vld [vmem:[#allocation5 + $0x18] sm:$0xff]
    %v50 = vld [vmem:[#allocation5 + $0x20] sm:$0xff]
    %v51 = vld [vmem:[#allocation5 + $0x28] sm:$0xff]
    %v52 = vld [vmem:[#allocation5 + $0x30] sm:$0xff]
    %v53 = vld [vmem:[#allocation5 + $0x38] sm:$0xff]
    %v54 = vld [vmem:[#allocation5 + $0x40] sm:$0xff]
    %v55 = vld [vmem:[#allocation5 + $0x48] sm:$0xff]
    %v56 = vld [vmem:[#allocation5 + $0x50] sm:$0xff]
    %v57 = vld [vmem:[#allocation5 + $0x58] sm:$0xff]
    %v58 = vld [vmem:[#allocation5 + $0x60] sm:$0xff]
    %v59 = vld [vmem:[#allocation5 + $0x68] sm:$0xff]
    %v60 = vld [vmem:[#allocation5 + $0x70] sm:$0xff]
    %v61 = vld [vmem:[#allocation5 + $0x78] sm:$0xff]
    %v62 = vld [vmem:[%s2] sm:$0x1]
    %v64 = vperm.slane %v62, 0
    %66 = vmatpush.msra.mxu0 %v61
    %67 = vmatpush.msra.mxu0 %v60
    %68 = vmatpush.msra.mxu0 %v59
    %69 = vmatpush.msra.mxu0 %v58
    %70 = vmatpush.msra.mxu0 %v57
    %71 = vmatpush.msra.mxu0 %v56
    %72 = vmatpush.msra.mxu0 %v55
    %73 = vmatpush.msra.mxu0 %v54
    %74 = vmatpush.msra.mxu0 %v53
    %75 = vmatpush.msra.mxu0 %v52
    %76 = vmatpush.msra.mxu0 %v51
    %77 = vmatpush.msra.mxu0 %v50
    %78 = vmatpush.msra.mxu0 %v49
    %79 = vmatpush.msra.mxu0 %v48
    %80 = vmatpush.msra.mxu0 %v47
    %81 = vmatpush.msra.mxu0 %v46
    %82 = vmatmul.f32.gmra.mxu0 %v45
    %v83 = vpop.f32.mrf.mxu0
    %v84 = vadd.f32 %v64, %v83
    %85 = vdwg.mxu0
    %v86 = vmax.f32 %v84, 0.0
    %87 = vst [vmem:[#allocation7] sm:$0xff] %v86
    // Predicated region
    $region22: #{tpu_custom_call.1} parent=1 // pred_check
      _
    $region23: #{tpu_custom_call.1} parent=1 // pred_check_branch
      %89 = sbr.rel (0) target = $region25
    $region24: #{tpu_custom_call.1} parent=1 // pred_region
      %91 = vsyncadd [#allocation4], 0
      %s93 = sshll.u32 [#allocation7], 4
      %s94 = int_to_ptr.vmem [resolvable:$true] %s93
      %s95 = sshll.u32 %s3, 4
      %s96 = int_to_ptr.hbm [resolvable:$true] %s95
      %98 = dma.vmem_to_hbm [thread:$0]  %s94, 128, %s96, [#allocation4]
    $region25: #{tpu_custom_call.1} parent=1 // pred_fallthru
      _
    // Predicated region
    $region26: #{tpu_custom_call.1} parent=1 // pred_check
      _
    $region27: #{tpu_custom_call.1} parent=1 // pred_check_branch
      %100 = sbr.rel (0) target = $region29
    $region28: #{tpu_custom_call.1} parent=1 // pred_region
      %102 = dma.done [#allocation4], 128
    $region29: #{tpu_custom_call.1} parent=1 // pred_fallthru
      _
    %103 = vsyncpa [#allocation3], 1
    %104 = vsyncpa [#allocation6], 1
    %105 = vsyncpa [#allocation4], 1

</llo_original>
